<compile_context>
chip_gen: v5e
topology: v5e:2x2
jax: 0.10.0
libtpu: 0.0.40
codegen_flags: <defaults>
</compile_context>

<pallas_src>
import functools

import jax
import jax.numpy as jnp
from jax.experimental import pallas as pl
from jax.experimental.pallas import tpu as pltpu

HIDDEN = 128


def autoencoder_kernel(x_ref,
                       w1_ref, b1_ref,
                       w2_ref, b2_ref,
                       w3_ref, b3_ref,
                       w4_ref, b4_ref,
                       out_ref):
    """Fused 4x (bf16 matmul -> f32 bias-add + ReLU) on one batch tile."""

    def layer(h_bf16, w_ref, b_ref):
        acc = jnp.dot(h_bf16, w_ref[...], preferred_element_type=jnp.float32)
        return jnp.maximum(acc + b_ref[...], 0.0)          # f32 epilogue

    # In-kernel f32 -> bf16 cast of the input tile (avoids a separate HLO
    # pass over x in HBM; the cast is VPU filler under the MXU/DMA).
    h = layer(x_ref[...].astype(jnp.bfloat16), w1_ref, b1_ref)
    h = layer(h.astype(jnp.bfloat16), w2_ref, b2_ref)
    h = layer(h.astype(jnp.bfloat16), w3_ref, b3_ref)
    y = layer(h.astype(jnp.bfloat16), w4_ref, b4_ref)
    out_ref[...] = y.astype(out_ref.dtype)


def _round_up(n, m):
    return (n + m - 1) // m * m


@functools.partial(jax.jit, static_argnames=("block_b", "out_dtype"))
def autoencoder_forward(x, params, *, block_b=512, out_dtype=jnp.float32):
    """x: (B, D) float32; params: bf16 weights (in,out) + f32 biases (1,out)."""
    B, D = x.shape
    out_bytes = jnp.dtype(out_dtype).itemsize

    # ---- batch-tile selection ------------------------------------------
    if B < 16:
        # Tiny batch: one whole-batch block (full-extent block is always legal).
        block_b = B
    else:
        # Guarantee >= 2 grid steps so v7x megacore shards the batch axis;
        # keep the sublane dim a multiple of 8 ((8,128) block rule).
        block_b = min(block_b, _round_up(pl.cdiv(B, 2), 8))
        block_b = max(8, _round_up(block_b, 8))
        # Budget double-buffered x(f32)+out tiles against v7x's 64 MiB VMEM.
        while 2 * block_b * D * (4 + out_bytes) > (24 << 20) and block_b > 256:
            block_b = max(256, _round_up(block_b // 2, 8))

    grid = (pl.cdiv(B, block_b),)   # last block masked when B % block_b != 0

    def full(shape):                 # resident weight / bias block
        return pl.BlockSpec(shape, lambda i: (0, 0))

    weight_bytes = sum(int(params[k].size) * params[k].dtype.itemsize
                       for k in params)
    flops = 2 * B * (D * HIDDEN + 2 * HIDDEN * HIDDEN + HIDDEN * D)
    bytes_accessed = B * D * x.dtype.itemsize + B * D * out_bytes + weight_bytes

    vmem_need = (2 * block_b * D * (x.dtype.itemsize + out_bytes)
                 + 2 * weight_bytes + (1 << 20))
    vmem_limit = int(min(max(vmem_need, 32 << 20), 64 << 20))

    # NOTE: if D is not a multiple of 128, pad w1/w4/b4 and the output feature
    # dim to the next multiple of 128 once at init to keep output stores
    # lane-dense (no-op for D=256 here).
    return pl.pallas_call(
        autoencoder_kernel,
        out_shape=jax.ShapeDtypeStruct((B, D), out_dtype),
        grid_spec=pltpu.PrefetchScalarGridSpec(
            num_scalar_prefetch=0,
            grid=grid,
            in_specs=[
                pl.BlockSpec((block_b, D), lambda i: (i, 0)),   # x tile
                full((D, HIDDEN)), full((1, HIDDEN)),           # layer 1
                full((HIDDEN, HIDDEN)), full((1, HIDDEN)),      # layer 2
                full((HIDDEN, HIDDEN)), full((1, HIDDEN)),      # layer 3
                full((HIDDEN, D)), full((1, D)),                # layer 4
            ],
            out_specs=pl.BlockSpec((block_b, D), lambda i: (i, 0)),
        ),
        compiler_params=pltpu.CompilerParams(
            dimension_semantics=("parallel",),
            vmem_limit_bytes=vmem_limit),
        cost_estimate=pl.CostEstimate(
            flops=flops, transcendentals=0, bytes_accessed=bytes_accessed),
    )(x, params["w1"], params["b1"], params["w2"], params["b2"],
      params["w3"], params["b3"], params["w4"], params["b4"])


def init_params(key, input_shape):
    """f32 params mimicking nn.Linear's U(-1/sqrt(in), 1/sqrt(in)) init."""
    dims = [(input_shape, HIDDEN), (HIDDEN, HIDDEN),
            (HIDDEN, HIDDEN), (HIDDEN, input_shape)]
    params = {}
    keys = jax.random.split(key, 2 * len(dims))
    for idx, (fan_in, fan_out) in enumerate(dims):
        bound = 1.0 / jnp.sqrt(fan_in)
        params[f"w{idx + 1}"] = jax.random.uniform(
            keys[2 * idx], (fan_in, fan_out),
            minval=-bound, maxval=bound, dtype=jnp.float32)
        params[f"b{idx + 1}"] = jax.random.uniform(
            keys[2 * idx + 1], (1, fan_out),
            minval=-bound, maxval=bound, dtype=jnp.float32)
    return params


def prepare_params(params_f32):
    """One-time conversion to kernel dtypes: bf16 weights, f32 biases."""
    out = {}
    for i in range(1, 5):
        out[f"w{i}"] = params_f32[f"w{i}"].astype(jnp.bfloat16)
        out[f"b{i}"] = params_f32[f"b{i}"].astype(jnp.float32)
    return out


def reference_forward(x, params):
    # Full-f32 reference (PyTorch AutoEncoder.forward semantics, incl. final ReLU).
    h = jnp.maximum(x @ params["w1"] + params["b1"], 0.0)
    h = jnp.maximum(h @ params["w2"] + params["b2"], 0.0)
    h = jnp.maximum(h @ params["w3"] + params["b3"], 0.0)
    return jnp.maximum(h @ params["w4"] + params["b4"], 0.0)


if __name__ == "__main__":
    key = jax.random.PRNGKey(0)
    k_x, k_x2, k_p = jax.random.split(key, 3)

    INPUT_SHAPE = 256  # multiple of 128 -> lane-dense output stores

    params_f32 = init_params(k_p, INPUT_SHAPE)
    params = prepare_params(params_f32)       # convert once, reuse every call

    # Small-batch path: single whole-batch block.
    B = 8
    x = jax.random.normal(k_x, (B, INPUT_SHAPE), dtype=jnp.float32)
    out = jax.block_until_ready(autoencoder_forward(x, params))
    ref = reference_forward(x, params_f32)
    assert out.shape == (B, INPUT_SHAPE)
    # bf16 MXU operands -> looser tolerance than a pure-f32 comparison.
    assert jnp.allclose(out, ref, atol=5e-2, rtol=5e-2), \
        "mismatch vs reference (small batch)"

    # Larger, non-divisible batch: 2 parallel grid steps + masked remainder
    # (exercises the cdiv-grid path with no wrapper pad/slice).
    B2 = 600
    x2 = jax.random.normal(k_x2, (B2, INPUT_SHAPE), dtype=jnp.float32)
    out2 = jax.block_until_ready(autoencoder_forward(x2, params))
    ref2 = reference_forward(x2, params_f32)
    assert out2.shape == (B2, INPUT_SHAPE)
    assert jnp.allclose(out2, ref2, atol=5e-2, rtol=5e-2), \
        "mismatch vs reference (tiled batch, masked remainder)"

    print("KERNEL_OK")
</pallas_src>

<mosaic_0001>
module attributes {stable_mosaic.version = 11 : i64} {
  func.func @autoencoder_kernel(%arg0: i32, %arg1: memref<8x256xf32, #tpu.memory_space<vmem>>, %arg2: memref<256x128xbf16, #tpu.memory_space<vmem>>, %arg3: memref<1x128xf32, #tpu.memory_space<vmem>>, %arg4: memref<128x128xbf16, #tpu.memory_space<vmem>>, %arg5: memref<1x128xf32, #tpu.memory_space<vmem>>, %arg6: memref<128x128xbf16, #tpu.memory_space<vmem>>, %arg7: memref<1x128xf32, #tpu.memory_space<vmem>>, %arg8: memref<128x256xbf16, #tpu.memory_space<vmem>>, %arg9: memref<1x256xf32, #tpu.memory_space<vmem>>, %arg10: memref<8x256xf32, #tpu.memory_space<vmem>>) attributes {dimension_semantics = [#tpu.dimension_semantics<parallel>], iteration_bounds = array<i64: 1>, scalar_prefetch = 0 : i64, scratch_operands = 0 : i64, tpu.core_type = #tpu.core_type<tc>, window_params = [{transform_indices = @transform_0, window_bounds = array<i64: 8, 256>}, {pipeline_mode = #tpu.pipeline_mode<synchronous>, transform_indices = @transform_1, window_bounds = array<i64: 256, 128>}, {pipeline_mode = #tpu.pipeline_mode<synchronous>, transform_indices = @transform_2, window_bounds = array<i64: 1, 128>}, {pipeline_mode = #tpu.pipeline_mode<synchronous>, transform_indices = @transform_3, window_bounds = array<i64: 128, 128>}, {pipeline_mode = #tpu.pipeline_mode<synchronous>, transform_indices = @transform_4, window_bounds = array<i64: 1, 128>}, {pipeline_mode = #tpu.pipeline_mode<synchronous>, transform_indices = @transform_5, window_bounds = array<i64: 128, 128>}, {pipeline_mode = #tpu.pipeline_mode<synchronous>, transform_indices = @transform_6, window_bounds = array<i64: 1, 128>}, {pipeline_mode = #tpu.pipeline_mode<synchronous>, transform_indices = @transform_7, window_bounds = array<i64: 128, 256>}, {pipeline_mode = #tpu.pipeline_mode<synchronous>, transform_indices = @transform_8, window_bounds = array<i64: 1, 256>}, {transform_indices = @transform_9, window_bounds = array<i64: 8, 256>}]} {
    %c0 = arith.constant 0 : index
    %c0_0 = arith.constant 0 : index
    %0 = vector.load %arg1[%c0, %c0_0] : memref<8x256xf32, #tpu.memory_space<vmem>>, vector<8x256xf32>
    %1 = arith.truncf %0 : vector<8x256xf32> to vector<8x256xbf16>
    %c0_1 = arith.constant 0 : index
    %c0_2 = arith.constant 0 : index
    %2 = vector.load %arg2[%c0_1, %c0_2] : memref<256x128xbf16, #tpu.memory_space<vmem>>, vector<256x128xbf16>
    %cst = arith.constant dense<0.000000e+00> : vector<8x128xf32>
    %3 = tpu.matmul %1, %2, %cst {dimension_numbers = #tpu.dot_dimension_numbers<[1], [0], [0], [1], [0, 0, 1, 1], [], []>} : vector<8x256xbf16>, vector<256x128xbf16>, vector<8x128xf32> -> vector<8x128xf32>
    %c0_3 = arith.constant 0 : index
    %c0_4 = arith.constant 0 : index
    %4 = vector.load %arg3[%c0_3, %c0_4] : memref<1x128xf32, #tpu.memory_space<vmem>>, vector<1x128xf32>
    %5 = vector.broadcast %4 : vector<1x128xf32> to vector<8x128xf32>
    %6 = arith.addf %3, %5 : vector<8x128xf32>
    %cst_5 = arith.constant 0.000000e+00 : f32
    %7 = vector.broadcast %cst_5 : f32 to vector<8x128xf32>
    %8 = arith.maximumf %6, %7 : vector<8x128xf32>
    %9 = arith.truncf %8 : vector<8x128xf32> to vector<8x128xbf16>
    %c0_6 = arith.constant 0 : index
    %c0_7 = arith.constant 0 : index
    %10 = vector.load %arg4[%c0_6, %c0_7] : memref<128x128xbf16, #tpu.memory_space<vmem>>, vector<128x128xbf16>
    %cst_8 = arith.constant dense<0.000000e+00> : vector<8x128xf32>
    %11 = tpu.matmul %9, %10, %cst_8 {dimension_numbers = #tpu.dot_dimension_numbers<[1], [0], [0], [1], [0, 0, 1, 1], [], []>} : vector<8x128xbf16>, vector<128x128xbf16>, vector<8x128xf32> -> vector<8x128xf32>
    %c0_9 = arith.constant 0 : index
    %c0_10 = arith.constant 0 : index
    %12 = vector.load %arg5[%c0_9, %c0_10] : memref<1x128xf32, #tpu.memory_space<vmem>>, vector<1x128xf32>
    %13 = vector.broadcast %12 : vector<1x128xf32> to vector<8x128xf32>
    %14 = arith.addf %11, %13 : vector<8x128xf32>
    %cst_11 = arith.constant 0.000000e+00 : f32
    %15 = vector.broadcast %cst_11 : f32 to vector<8x128xf32>
    %16 = arith.maximumf %14, %15 : vector<8x128xf32>
    %17 = arith.truncf %16 : vector<8x128xf32> to vector<8x128xbf16>
    %c0_12 = arith.constant 0 : index
    %c0_13 = arith.constant 0 : index
    %18 = vector.load %arg6[%c0_12, %c0_13] : memref<128x128xbf16, #tpu.memory_space<vmem>>, vector<128x128xbf16>
    %cst_14 = arith.constant dense<0.000000e+00> : vector<8x128xf32>
    %19 = tpu.matmul %17, %18, %cst_14 {dimension_numbers = #tpu.dot_dimension_numbers<[1], [0], [0], [1], [0, 0, 1, 1], [], []>} : vector<8x128xbf16>, vector<128x128xbf16>, vector<8x128xf32> -> vector<8x128xf32>
    %c0_15 = arith.constant 0 : index
    %c0_16 = arith.constant 0 : index
    %20 = vector.load %arg7[%c0_15, %c0_16] : memref<1x128xf32, #tpu.memory_space<vmem>>, vector<1x128xf32>
    %21 = vector.broadcast %20 : vector<1x128xf32> to vector<8x128xf32>
    %22 = arith.addf %19, %21 : vector<8x128xf32>
    %cst_17 = arith.constant 0.000000e+00 : f32
    %23 = vector.broadcast %cst_17 : f32 to vector<8x128xf32>
    %24 = arith.maximumf %22, %23 : vector<8x128xf32>
    %25 = arith.truncf %24 : vector<8x128xf32> to vector<8x128xbf16>
    %c0_18 = arith.constant 0 : index
    %c0_19 = arith.constant 0 : index
    %26 = vector.load %arg8[%c0_18, %c0_19] : memref<128x256xbf16, #tpu.memory_space<vmem>>, vector<128x256xbf16>
    %cst_20 = arith.constant dense<0.000000e+00> : vector<8x256xf32>
    %27 = tpu.matmul %25, %26, %cst_20 {dimension_numbers = #tpu.dot_dimension_numbers<[1], [0], [0], [1], [0, 0, 1, 1], [], []>} : vector<8x128xbf16>, vector<128x256xbf16>, vector<8x256xf32> -> vector<8x256xf32>
    %c0_21 = arith.constant 0 : index
    %c0_22 = arith.constant 0 : index
    %28 = vector.load %arg9[%c0_21, %c0_22] : memref<1x256xf32, #tpu.memory_space<vmem>>, vector<1x256xf32>
    %29 = vector.broadcast %28 : vector<1x256xf32> to vector<8x256xf32>
    %30 = arith.addf %27, %29 : vector<8x256xf32>
    %cst_23 = arith.constant 0.000000e+00 : f32
    %31 = vector.broadcast %cst_23 : f32 to vector<8x256xf32>
    %32 = arith.maximumf %30, %31 : vector<8x256xf32>
    %c0_24 = arith.constant 0 : index
    %c0_25 = arith.constant 0 : index
    %33 = vector.load %arg10[%c0_24, %c0_25] : memref<8x256xf32, #tpu.memory_space<vmem>>, vector<8x256xf32>
    tpu.vector_store %arg10[%c0_24, %c0_25], %32 {strides = array<i32>} : memref<8x256xf32, #tpu.memory_space<vmem>>, vector<8x256xf32>,
    return
  }
  func.func @transform_0(%arg0: i32) -> (i32, i32) {
    %c0_i32 = arith.constant 0 : i32
    %c0_i32_0 = arith.constant 0 : i32
    return %arg0, %c0_i32 : i32, i32
  }
  func.func @transform_1(%arg0: i32) -> (i32, i32) {
    %c0_i32 = arith.constant 0 : i32
    %c0_i32_0 = arith.constant 0 : i32
    %c0_i32_1 = arith.constant 0 : i32
    return %c0_i32, %c0_i32_0 : i32, i32
  }
  func.func @transform_2(%arg0: i32) -> (i32, i32) {
    %c0_i32 = arith.constant 0 : i32
    %c0_i32_0 = arith.constant 0 : i32
    %c0_i32_1 = arith.constant 0 : i32
    return %c0_i32, %c0_i32_0 : i32, i32
  }
  func.func @transform_3(%arg0: i32) -> (i32, i32) {
    %c0_i32 = arith.constant 0 : i32
    %c0_i32_0 = arith.constant 0 : i32
    %c0_i32_1 = arith.constant 0 : i32
    return %c0_i32, %c0_i32_0 : i32, i32
  }
  func.func @transform_4(%arg0: i32) -> (i32, i32) {
    %c0_i32 = arith.constant 0 : i32
    %c0_i32_0 = arith.constant 0 : i32
    %c0_i32_1 = arith.constant 0 : i32
    return %c0_i32, %c0_i32_0 : i32, i32
  }
  func.func @transform_5(%arg0: i32) -> (i32, i32) {
    %c0_i32 = arith.constant 0 : i32
    %c0_i32_0 = arith.constant 0 : i32
    %c0_i32_1 = arith.constant 0 : i32
    return %c0_i32, %c0_i32_0 : i32, i32
  }
  func.func @transform_6(%arg0: i32) -> (i32, i32) {
    %c0_i32 = arith.constant 0 : i32
    %c0_i32_0 = arith.constant 0 : i32
    %c0_i32_1 = arith.constant 0 : i32
    return %c0_i32, %c0_i32_0 : i32, i32
  }
  func.func @transform_7(%arg0: i32) -> (i32, i32) {
    %c0_i32 = arith.constant 0 : i32
    %c0_i32_0 = arith.constant 0 : i32
    %c0_i32_1 = arith.constant 0 : i32
    return %c0_i32, %c0_i32_0 : i32, i32
  }
  func.func @transform_8(%arg0: i32) -> (i32, i32) {
    %c0_i32 = arith.constant 0 : i32
    %c0_i32_0 = arith.constant 0 : i32
    %c0_i32_1 = arith.constant 0 : i32
    return %c0_i32, %c0_i32_0 : i32, i32
  }
  func.func @transform_9(%arg0: i32) -> (i32, i32) {
    %c0_i32 = arith.constant 0 : i32
    %c0_i32_0 = arith.constant 0 : i32
    return %arg0, %c0_i32 : i32, i32
  }
}

</mosaic_0001>

<llo_original>
// kernel: autoencoder_forward.1
$region0: #{autoencoder_forward.1}
  #allocation0 [shape = 'u32[]', space=smem, size = 0x4, offset = 0x4, fixed_abs, tag = 'smem constant byte address 0x4 - core index']
  #allocation1 [shape = 'u32[72,128]{1,0:T(1,128)}', space=vmem, size = 0x9000, scoped, tag = 'internal scratch']
  %s0 = inlined_call_operand.hbm [shape: f32[8,256], index: 0, kind: input, shape index: {}]
  %s1 = inlined_call_operand.hbm [shape: bf16[256,128], index: 1, kind: input, shape index: {}]
  %s2 = inlined_call_operand.hbm [shape: f32[1,128], index: 2, kind: input, shape index: {}]
  %s3 = inlined_call_operand.hbm [shape: bf16[128,128], index: 3, kind: input, shape index: {}]
  %s4 = inlined_call_operand.vmem [shape: f32[1,128], index: 4, kind: input, shape index: {}]
  %s5 = inlined_call_operand.hbm [shape: bf16[128,128], index: 5, kind: input, shape index: {}]
  %s6 = inlined_call_operand.hbm [shape: f32[1,128], index: 6, kind: input, shape index: {}]
  %s7 = inlined_call_operand.hbm [shape: bf16[128,256], index: 7, kind: input, shape index: {}]
  %s8 = inlined_call_operand.vmem [shape: f32[1,256], index: 8, kind: input, shape index: {}]
  %s9 = inlined_call_operand.hbm [shape: f32[8,256], index: 9, kind: output, shape index: {}]
  %s10 = sld [smem:[#allocation0]]
  $region74: #{autoencoder_forward.1} parent=0
    _
  %s12 = ssub.s32 1, %s10
  %s13 = scalar_select 0, %s12, %s10
  $region1: #{autoencoder_forward.1} parent=0
    #allocation2 [shape = 'u8[8192]{0}', space=vmem, size = 0x2000, scoped, tag = 'input window, operand 0, single buffered']
    #allocation3 [shape = 's32[1]{0}', space=sflag, size = 0x4, scoped, tag = 'scoped memory for autoencoder_forward.1']
    #allocation4 [shape = 's32[1]{0}', space=sflag, size = 0x4, scoped, tag = 'scoped memory for autoencoder_forward.1']
    #allocation5 [shape = 'u8[65536]{0}', space=vmem, size = 0x10000, scoped, tag = 'input window, operand 1, single buffered']
    #allocation6 [shape = 's32[1]{0}', space=sflag, size = 0x4, scoped, tag = 'scoped memory for autoencoder_forward.1']
    #allocation7 [shape = 'u8[512]{0}', space=vmem, size = 0x400, scoped, tag = 'input window, operand 2, single buffered']
    #allocation8 [shape = 'u8[32768]{0}', space=vmem, size = 0x8000, scoped, tag = 'input window, operand 3, single buffered']
    #allocation9 [shape = 's32[1]{0}', space=sflag, size = 0x4, scoped, tag = 'scoped memory for autoencoder_forward.1']
    #allocation10 [shape = 'u8[32768]{0}', space=vmem, size = 0x8000, scoped, tag = 'input window, operand 5, single buffered']
    #allocation11 [shape = 'u8[512]{0}', space=vmem, size = 0x400, scoped, tag = 'input window, operand 6, single buffered']
    #allocation12 [shape = 's32[1]{0}', space=sflag, size = 0x4, scoped, tag = 'scoped memory for autoencoder_forward.1']
    #allocation13 [shape = 'u8[65536]{0}', space=vmem, size = 0x10000, scoped, tag = 'input window, operand 7, single buffered']
    #allocation14 [shape = 'u8[8192]{0}', space=vmem, size = 0x2000, scoped, tag = 'output window, operand 0, single buffered']
    %14 = vsyncpa [#allocation3], 0
    %15 = vsyncpa [#allocation6], 0
    %16 = vsyncpa [#allocation9], 0
    %17 = vsyncpa [#allocation12], 0
    %18 = vsyncpa [#allocation4], 0
    // Predicated region
    $region2: #{autoencoder_forward.1} parent=1 // pred_check
      _
    $region3: #{autoencoder_forward.1} parent=1 // pred_check_branch
      %20 = sbr.rel (0) target = $region5
    $region4: #{autoencoder_forward.1} parent=1 // pred_region
      %22 = vsyncadd [#allocation3], 0
      %s24 = sshll.u32 %s0, 4
      %s25 = int_to_ptr.hbm [resolvable:$true] %s24
      %s26 = sshll.u32 [#allocation2], 4
      %s27 = int_to_ptr.vmem [resolvable:$true] %s26
      %29 = dma.hbm_to_vmem [thread:$0]  %s25, 256, %s27, [#allocation3]
    $region5: #{autoencoder_forward.1} parent=1 // pred_fallthru
      _
    // Predicated region
    $region6: #{autoencoder_forward.1} parent=1 // pred_check
      _
    $region7: #{autoencoder_forward.1} parent=1 // pred_check_branch
      %31 = sbr.rel (0) target = $region9
    $region8: #{autoencoder_forward.1} parent=1 // pred_region
      %33 = vsyncadd [#allocation6], 0
      %s34 = sshll.u32 %s1, 4
      %s35 = int_to_ptr.hbm [resolvable:$true] %s34
      %s36 = sshll.u32 [#allocation5], 4
      %s37 = int_to_ptr.vmem [resolvable:$true] %s36
      %42 = dma.hbm_to_vmem [thread:$0]  %s35, 2048, %s37, [#allocation6], 64, 64, 4
    $region9: #{autoencoder_forward.1} parent=1 // pred_fallthru
      _
    // Predicated region
    $region10: #{autoencoder_forward.1} parent=1 // pred_check
      _
    $region11: #{autoencoder_forward.1} parent=1 // pred_check_branch
      %44 = sbr.rel (0) target = $region13
    $region12: #{autoencoder_forward.1} parent=1 // pred_region
      %46 = vsyncadd [#allocation6], 0
      %s48 = sshll.u32 %s2, 4
      %s49 = int_to_ptr.hbm [resolvable:$true] %s48
      %s50 = sshll.u32 [#allocation7], 4
      %s51 = int_to_ptr.vmem [resolvable:$true] %s50
      %53 = dma.hbm_to_vmem [thread:$0]  %s49, 16, %s51, [#allocation6]
    $region13: #{autoencoder_forward.1} parent=1 // pred_fallthru
      _
    // Predicated region
    $region14: #{autoencoder_forward.1} parent=1 // pred_check
      _
    $region15: #{autoencoder_forward.1} parent=1 // pred_check_branch
      %55 = sbr.rel (0) target = $region17
    $region16: #{autoencoder_forward.1} parent=1 // pred_region
      %57 = vsyncadd [#allocation9], 0
      %s58 = sshll.u32 %s3, 4
      %s59 = int_to_ptr.hbm [resolvable:$true] %s58
      %s60 = sshll.u32 [#allocation8], 4
      %s61 = int_to_ptr.vmem [resolvable:$true] %s60
      %66 = dma.hbm_to_vmem [thread:$0]  %s59, 1024, %s61, [#allocation9], 64, 64, 4
    $region17: #{autoencoder_forward.1} parent=1 // pred_fallthru
      _
    // Predicated region
    $region18: #{autoencoder_forward.1} parent=1 // pred_check
      _
    $region19: #{autoencoder_forward.1} parent=1 // pred_check_branch
      %68 = sbr.rel (0) target = $region21
    $region20: #{autoencoder_forward.1} parent=1 // pred_region
      _
    $region21: #{autoencoder_forward.1} parent=1 // pred_fallthru
      _
    // Predicated region
    $region22: #{autoencoder_forward.1} parent=1 // pred_check
      _
    $region23: #{autoencoder_forward.1} parent=1 // pred_check_branch
      %70 = sbr.rel (0) target = $region25
    $region24: #{autoencoder_forward.1} parent=1 // pred_region
      %72 = vsyncadd [#allocation9], 0
      %s73 = sshll.u32 %s5, 4
      %s74 = int_to_ptr.hbm [resolvable:$true] %s73
      %s75 = sshll.u32 [#allocation10], 4
      %s76 = int_to_ptr.vmem [resolvable:$true] %s75
      %81 = dma.hbm_to_vmem [thread:$0]  %s74, 1024, %s76, [#allocation9], 64, 64, 4
    $region25: #{autoencoder_forward.1} parent=1 // pred_fallthru
      _
    // Predicated region
    $region26: #{autoencoder_forward.1} parent=1 // pred_check
      _
    $region27: #{autoencoder_forward.1} parent=1 // pred_check_branch
      %83 = sbr.rel (0) target = $region29
    $region28: #{autoencoder_forward.1} parent=1 // pred_region
      %85 = vsyncadd [#allocation12], 0
      %s87 = sshll.u32 %s6, 4
      %s88 = int_to_ptr.hbm [resolvable:$true] %s87
      %s89 = sshll.u32 [#allocation11], 4
      %s90 = int_to_ptr.vmem [resolvable:$true] %s89
      %92 = dma.hbm_to_vmem [thread:$0]  %s88, 16, %s90, [#allocation12]
    $region29: #{autoencoder_forward.1} parent=1 // pred_fallthru
      _
    // Predicated region
    $region30: #{autoencoder_forward.1} parent=1 // pred_check
      _
    $region31: #{autoencoder_forward.1} parent=1 // pred_check_branch
      %94 = sbr.rel (0) target = $region33
    $region32: #{autoencoder_forward.1} parent=1 // pred_region
      %96 = vsyncadd [#allocation12], 0
      %s97 = sshll.u32 %s7, 4
      %s98 = int_to_ptr.hbm [resolvable:$true] %s97
      %s99 = sshll.u32 [#allocation13], 4
      %s100 = int_to_ptr.vmem [resolvable:$true] %s99
      %105 = dma.hbm_to_vmem [thread:$0]  %s98, 2048, %s100, [#allocation12], 128, 128, 8
    $region33: #{autoencoder_forward.1} parent=1 // pred_fallthru
      _
    // Predicated region
    $region34: #{autoencoder_forward.1} parent=1 // pred_check
      _
    $region35: #{autoencoder_forward.1} parent=1 // pred_check_branch
      %107 = sbr.rel (0) target = $region37
    $region36: #{autoencoder_forward.1} parent=1 // pred_region
      _
    $region37: #{autoencoder_forward.1} parent=1 // pred_fallthru
      _
    // Predicated region
    $region38: #{autoencoder_forward.1} parent=1 // pred_check
      _
    $region39: #{autoencoder_forward.1} parent=1 // pred_check_branch
      %109 = sbr.rel (0) target = $region41
    $region40: #{autoencoder_forward.1} parent=1 // pred_region
      %111 = dma.done [#allocation3], 256
    $region41: #{autoencoder_forward.1} parent=1 // pred_fallthru
      _
    // Predicated region
    $region42: #{autoencoder_forward.1} parent=1 // pred_check
      _
    $region43: #{autoencoder_forward.1} parent=1 // pred_check_branch
      %113 = sbr.rel (0) target = $region45
    $region44: #{autoencoder_forward.1} parent=1 // pred_region
      %115 = dma.done [#allocation6], 2048
    $region45: #{autoencoder_forward.1} parent=1 // pred_fallthru
      _
    // Predicated region
    $region46: #{autoencoder_forward.1} parent=1 // pred_check
      _
    $region47: #{autoencoder_forward.1} parent=1 // pred_check_branch
      %117 = sbr.rel (0) target = $region49
    $region48: #{autoencoder_forward.1} parent=1 // pred_region
      %119 = dma.done [#allocation6], 16
    $region49: #{autoencoder_forward.1} parent=1 // pred_fallthru
      _
    // Predicated region
    $region50: #{autoencoder_forward.1} parent=1 // pred_check
      _
    $region51: #{autoencoder_forward.1} parent=1 // pred_check_branch
      %121 = sbr.rel (0) target = $region53
    $region52: #{autoencoder_forward.1} parent=1 // pred_region
      %123 = dma.done [#allocation9], 1024
    $region53: #{autoencoder_forward.1} parent=1 // pred_fallthru
      _
    // Predicated region
    $region54: #{autoencoder_forward.1} parent=1 // pred_check
      _
    $region55: #{autoencoder_forward.1} parent=1 // pred_check_branch
      %125 = sbr.rel (0) target = $region57
    $region56: #{autoencoder_forward.1} parent=1 // pred_region
      %127 = dma.done [#allocation9], 1024
    $region57: #{autoencoder_forward.1} parent=1 // pred_fallthru
      _
    // Predicated region
    $region58: #{autoencoder_forward.1} parent=1 // pred_check
      _
    $region59: #{autoencoder_forward.1} parent=1 // pred_check_branch
      %129 = sbr.rel (0) target = $region61
    $region60: #{autoencoder_forward.1} parent=1 // pred_region
      %131 = dma.done [#allocation12], 16
    $region61: #{autoencoder_forward.1} parent=1 // pred_fallthru
      _
    // Predicated region
    $region62: #{autoencoder_forward.1} parent=1 // pred_check
      _
    $region63: #{autoencoder_forward.1} parent=1 // pred_check_branch
      %133 = sbr.rel (0) target = $region65
    $region64: #{autoencoder_forward.1} parent=1 // pred_region
      %135 = dma.done [#allocation12], 2048
    $region65: #{autoencoder_forward.1} parent=1 // pred_fallthru
      _
    %v136 = vld [vmem:[#allocation2] sm:$0xff]
    %v137 = vld [vmem:[#allocation2 + $0x8] sm:$0xff]
    %v138 = vpack.c.bf16 %v136, %v136
    %v139 = vpack.c.bf16 %v137, %v137
    %v140 = vld [vmem:[#allocation5] sm:$0xf]
    %v141 = vld [vmem:[#allocation5 + $0x4] sm:$0xf]
    %v142 = vld [vmem:[#allocation5 + $0x8] sm:$0xf]
    %v143 = vld [vmem:[#allocation5 + $0xc] sm:$0xf]
    %v144 = vld [vmem:[#allocation5 + $0x10] sm:$0xf]
    %v145 = vld [vmem:[#allocation5 + $0x14] sm:$0xf]
    %v146 = vld [vmem:[#allocation5 + $0x18] sm:$0xf]
    %v147 = vld [vmem:[#allocation5 + $0x1c] sm:$0xf]
    %v148 = vld [vmem:[#allocation5 + $0x20] sm:$0xf]
    %v149 = vld [vmem:[#allocation5 + $0x24] sm:$0xf]
    %v150 = vld [vmem:[#allocation5 + $0x28] sm:$0xf]
    %v151 = vld [vmem:[#allocation5 + $0x2c] sm:$0xf]
    %v152 = vld [vmem:[#allocation5 + $0x30] sm:$0xf]
    %v153 = vld [vmem:[#allocation5 + $0x34] sm:$0xf]
    %v154 = vld [vmem:[#allocation5 + $0x38] sm:$0xf]
    %v155 = vld [vmem:[#allocation5 + $0x3c] sm:$0xf]
    %v156 = vld [vmem:[#allocation5 + $0x40] sm:$0xf]
    %v157 = vld [vmem:[#allocation5 + $0x44] sm:$0xf]
    %v158 = vld [vmem:[#allocation5 + $0x48] sm:$0xf]
    %v159 = vld [vmem:[#allocation5 + $0x4c] sm:$0xf]
    %v160 = vld [vmem:[#allocation5 + $0x50] sm:$0xf]
    %v161 = vld [vmem:[#allocation5 + $0x54] sm:$0xf]
    %v162 = vld [vmem:[#allocation5 + $0x58] sm:$0xf]
    %v163 = vld [vmem:[#allocation5 + $0x5c] sm:$0xf]
    %v164 = vld [vmem:[#allocation5 + $0x60] sm:$0xf]
    %v165 = vld [vmem:[#allocation5 + $0x64] sm:$0xf]
    %v166 = vld [vmem:[#allocation5 + $0x68] sm:$0xf]
    %v167 = vld [vmem:[#allocation5 + $0x6c] sm:$0xf]
    %v168 = vld [vmem:[#allocation5 + $0x70] sm:$0xf]
    %v169 = vld [vmem:[#allocation5 + $0x74] sm:$0xf]
    %v170 = vld [vmem:[#allocation5 + $0x78] sm:$0xf]
    %v171 = vld [vmem:[#allocation5 + $0x7c] sm:$0xf]
    %v172 = vld [vmem:[#allocation7] sm:$0x1]
    %v174 = vperm.slane %v172, 0
    %v208 = vunpack.c.l.b16 %v140
    %v209 = vunpack.c.l.b16 %v141
    %v210 = vunpack.c.l.b16 %v142
    %v211 = vunpack.c.l.b16 %v143
    %v212 = vunpack.c.l.b16 %v144
    %v213 = vunpack.c.l.b16 %v145
    %v214 = vunpack.c.l.b16 %v146
    %v215 = vunpack.c.l.b16 %v147
    %v216 = vunpack.c.l.b16 %v148
    %v217 = vunpack.c.l.b16 %v149
    %v218 = vunpack.c.l.b16 %v150
    %v219 = vunpack.c.l.b16 %v151
    %v220 = vunpack.c.l.b16 %v152
    %v221 = vunpack.c.l.b16 %v153
    %v222 = vunpack.c.l.b16 %v154
    %v223 = vunpack.c.l.b16 %v155
    %v224 = vunpack.c.l.b16 %v156
    %v225 = vunpack.c.l.b16 %v157
    %v226 = vunpack.c.l.b16 %v158
    %v227 = vunpack.c.l.b16 %v159
    %v228 = vunpack.c.l.b16 %v160
    %v229 = vunpack.c.l.b16 %v161
    %v230 = vunpack.c.l.b16 %v162
    %v231 = vunpack.c.l.b16 %v163
    %v232 = vunpack.c.l.b16 %v164
    %v233 = vunpack.c.l.b16 %v165
    %v234 = vunpack.c.l.b16 %v166
    %v235 = vunpack.c.l.b16 %v167
    %v236 = vunpack.c.l.b16 %v168
    %v237 = vunpack.c.l.b16 %v169
    %v238 = vunpack.c.l.b16 %v170
    %v239 = vunpack.c.l.b16 %v171
    %v240 = vpack.c.b16 %v209, %v208
    %v241 = vpack.c.b16 %v211, %v210
    %v242 = vpack.c.b16 %v213, %v212
    %v243 = vpack.c.b16 %v215, %v214
    %v244 = vpack.c.b16 %v217, %v216
    %v245 = vpack.c.b16 %v219, %v218
    %v246 = vpack.c.b16 %v221, %v220
    %v247 = vpack.c.b16 %v223, %v222
    %v248 = vpack.c.b16 %v225, %v224
    %v249 = vpack.c.b16 %v227, %v226
    %v250 = vpack.c.b16 %v229, %v228
    %v251 = vpack.c.b16 %v231, %v230
    %v252 = vpack.c.b16 %v233, %v232
    %v253 = vpack.c.b16 %v235, %v234
    %v254 = vpack.c.b16 %v237, %v236
    %v255 = vpack.c.b16 %v239, %v238
    %272 = vmatpush.bf16.msra.mxu0 %v247
    %273 = vmatpush.bf16.msra.mxu0 %v246
    %274 = vmatpush.bf16.msra.mxu0 %v245
    %275 = vmatpush.bf16.msra.mxu0 %v244
    %276 = vmatpush.bf16.msra.mxu0 %v243
    %277 = vmatpush.bf16.msra.mxu0 %v242
    %278 = vmatpush.bf16.msra.mxu0 %v241
    %279 = vmatpush.bf16.msra.mxu0 %v240
    %280 = vmatmul.bf16.gmra.mxu0 %v138
    %v281 = vpop.f32.mrf.mxu0
    %v282 = vadd.f32 %v174, %v281
    %v283 = vpop.f32.mrf.mxu0
    %284 = vdwg.mxu0
    %285 = vmatpush.bf16.msra.mxu0 %v255
    %286 = vmatpush.bf16.msra.mxu0 %v254
    %287 = vmatpush.bf16.msra.mxu0 %v253
    %288 = vmatpush.bf16.msra.mxu0 %v252
    %289 = vmatpush.bf16.msra.mxu0 %v251
    %290 = vmatpush.bf16.msra.mxu0 %v250
    %291 = vmatpush.bf16.msra.mxu0 %v249
    %292 = vmatpush.bf16.msra.mxu0 %v248
    %293 = vmatmul.bf16.gmra.mxu0 %v139
    %v294 = vpop.f32.mrf.mxu0
    %v295 = vadd.f32 %v282, %v294
    %v296 = vpop.f32.mrf.mxu0
    %297 = vdwg.mxu0
    %v298 = vmax.f32 %v295, 0.0
    %v299 = vpack.c.bf16 %v298, %v298
    %v300 = vld [vmem:[#allocation8] sm:$0xf]
    %v301 = vld [vmem:[#allocation8 + $0x4] sm:$0xf]
    %v302 = vld [vmem:[#allocation8 + $0x8] sm:$0xf]
    %v303 = vld [vmem:[#allocation8 + $0xc] sm:$0xf]
    %v304 = vld [vmem:[#allocation8 + $0x10] sm:$0xf]
    %v305 = vld [vmem:[#allocation8 + $0x14] sm:$0xf]
    %v306 = vld [vmem:[#allocation8 + $0x18] sm:$0xf]
    %v307 = vld [vmem:[#allocation8 + $0x1c] sm:$0xf]
    %v308 = vld [vmem:[#allocation8 + $0x20] sm:$0xf]
    %v309 = vld [vmem:[#allocation8 + $0x24] sm:$0xf]
    %v310 = vld [vmem:[#allocation8 + $0x28] sm:$0xf]
    %v311 = vld [vmem:[#allocation8 + $0x2c] sm:$0xf]
    %v312 = vld [vmem:[#allocation8 + $0x30] sm:$0xf]
    %v313 = vld [vmem:[#allocation8 + $0x34] sm:$0xf]
    %v314 = vld [vmem:[#allocation8 + $0x38] sm:$0xf]
    %v315 = vld [vmem:[#allocation8 + $0x3c] sm:$0xf]
    %v316 = vld [vmem:[%s4] sm:$0x1]
    %v318 = vperm.slane %v316, 0
    %v336 = vunpack.c.l.b16 %v300
    %v337 = vunpack.c.l.b16 %v301
    %v338 = vunpack.c.l.b16 %v302
    %v339 = vunpack.c.l.b16 %v303
    %v340 = vunpack.c.l.b16 %v304
    %v341 = vunpack.c.l.b16 %v305
    %v342 = vunpack.c.l.b16 %v306
    %v343 = vunpack.c.l.b16 %v307
    %v344 = vunpack.c.l.b16 %v308
    %v345 = vunpack.c.l.b16 %v309
    %v346 = vunpack.c.l.b16 %v310
    %v347 = vunpack.c.l.b16 %v311
    %v348 = vunpack.c.l.b16 %v312
    %v349 = vunpack.c.l.b16 %v313
    %v350 = vunpack.c.l.b16 %v314
    %v351 = vunpack.c.l.b16 %v315
    %v352 = vpack.c.b16 %v337, %v336
    %v353 = vpack.c.b16 %v339, %v338
    %v354 = vpack.c.b16 %v341, %v340
    %v355 = vpack.c.b16 %v343, %v342
    %v356 = vpack.c.b16 %v345, %v344
    %v357 = vpack.c.b16 %v347, %v346
    %v358 = vpack.c.b16 %v349, %v348
    %v359 = vpack.c.b16 %v351, %v350
    %368 = vmatpush.bf16.msra.mxu0 %v359
    %369 = vmatpush.bf16.msra.mxu0 %v358
    %370 = vmatpush.bf16.msra.mxu0 %v357
    %371 = vmatpush.bf16.msra.mxu0 %v356
    %372 = vmatpush.bf16.msra.mxu0 %v355
    %373 = vmatpush.bf16.msra.mxu0 %v354
    %374 = vmatpush.bf16.msra.mxu0 %v353
    %375 = vmatpush.bf16.msra.mxu0 %v352
    %376 = vmatmul.bf16.gmra.mxu0 %v299
    %v377 = vpop.f32.mrf.mxu0
    %v378 = vadd.f32 %v318, %v377
    %v379 = vpop.f32.mrf.mxu0
    %380 = vdwg.mxu0
    %v381 = vmax.f32 %v378, 0.0
    %v382 = vpack.c.bf16 %v381, %v381
    %v383 = vld [vmem:[#allocation10] sm:$0xf]
    %v384 = vld [vmem:[#allocation10 + $0x4] sm:$0xf]
    %v385 = vld [vmem:[#allocation10 + $0x8] sm:$0xf]
    %v386 = vld [vmem:[#allocation10 + $0xc] sm:$0xf]
    %v387 = vld [vmem:[#allocation10 + $0x10] sm:$0xf]
    %v388 = vld [vmem:[#allocation10 + $0x14] sm:$0xf]
    %v389 = vld [vmem:[#allocation10 + $0x18] sm:$0xf]
    %v390 = vld [vmem:[#allocation10 + $0x1c] sm:$0xf]
    %v391 = vld [vmem:[#allocation10 + $0x20] sm:$0xf]
    %v392 = vld [vmem:[#allocation10 + $0x24] sm:$0xf]
    %v393 = vld [vmem:[#allocation10 + $0x28] sm:$0xf]
    %v394 = vld [vmem:[#allocation10 + $0x2c] sm:$0xf]
    %v395 = vld [vmem:[#allocation10 + $0x30] sm:$0xf]
    %v396 = vld [vmem:[#allocation10 + $0x34] sm:$0xf]
    %v397 = vld [vmem:[#allocation10 + $0x38] sm:$0xf]
    %v398 = vld [vmem:[#allocation10 + $0x3c] sm:$0xf]
    %v399 = vld [vmem:[#allocation11] sm:$0x1]
    %v401 = vperm.slane %v399, 0
    %v419 = vunpack.c.l.b16 %v383
    %v420 = vunpack.c.l.b16 %v384
    %v421 = vunpack.c.l.b16 %v385
    %v422 = vunpack.c.l.b16 %v386
    %v423 = vunpack.c.l.b16 %v387
    %v424 = vunpack.c.l.b16 %v388
    %v425 = vunpack.c.l.b16 %v389
    %v426 = vunpack.c.l.b16 %v390
    %v427 = vunpack.c.l.b16 %v391
    %v428 = vunpack.c.l.b16 %v392
    %v429 = vunpack.c.l.b16 %v393
    %v430 = vunpack.c.l.b16 %v394
    %v431 = vunpack.c.l.b16 %v395
    %v432 = vunpack.c.l.b16 %v396
    %v433 = vunpack.c.l.b16 %v397
    %v434 = vunpack.c.l.b16 %v398
    %v435 = vpack.c.b16 %v420, %v419
    %v436 = vpack.c.b16 %v422, %v421
    %v437 = vpack.c.b16 %v424, %v423
    %v438 = vpack.c.b16 %v426, %v425
    %v439 = vpack.c.b16 %v428, %v427
    %v440 = vpack.c.b16 %v430, %v429
    %v441 = vpack.c.b16 %v432, %v431
    %v442 = vpack.c.b16 %v434, %v433
    %451 = vmatpush.bf16.msra.mxu0 %v442
    %452 = vmatpush.bf16.msra.mxu0 %v441
    %453 = vmatpush.bf16.msra.mxu0 %v440
    %454 = vmatpush.bf16.msra.mxu0 %v439
    %455 = vmatpush.bf16.msra.mxu0 %v438
    %456 = vmatpush.bf16.msra.mxu0 %v437
    %457 = vmatpush.bf16.msra.mxu0 %v436
    %458 = vmatpush.bf16.msra.mxu0 %v435
    %459 = vmatmul.bf16.gmra.mxu0 %v382
    %v460 = vpop.f32.mrf.mxu0
    %v461 = vadd.f32 %v401, %v460
    %v462 = vpop.f32.mrf.mxu0
    %463 = vdwg.mxu0
    %v464 = vmax.f32 %v461, 0.0
    %v465 = vpack.c.bf16 %v464, %v464
    %v466 = vld [vmem:[#allocation13] sm:$0xff]
    %v467 = vld [vmem:[#allocation13 + $0x8] sm:$0xff]
    %v468 = vld [vmem:[#allocation13 + $0x10] sm:$0xff]
    %v469 = vld [vmem:[#allocation13 + $0x18] sm:$0xff]
    %v470 = vld [vmem:[#allocation13 + $0x20] sm:$0xff]
    %v471 = vld [vmem:[#allocation13 + $0x28] sm:$0xff]
    %v472 = vld [vmem:[#allocation13 + $0x30] sm:$0xff]
    %v473 = vld [vmem:[#allocation13 + $0x38] sm:$0xff]
    %v474 = vld [vmem:[#allocation13 + $0x40] sm:$0xff]
    %v475 = vld [vmem:[#allocation13 + $0x48] sm:$0xff]
    %v476 = vld [vmem:[#allocation13 + $0x50] sm:$0xff]
    %v477 = vld [vmem:[#allocation13 + $0x58] sm:$0xff]
    %v478 = vld [vmem:[#allocation13 + $0x60] sm:$0xff]
    %v479 = vld [vmem:[#allocation13 + $0x68] sm:$0xff]
    %v480 = vld [vmem:[#allocation13 + $0x70] sm:$0xff]
    %v481 = vld [vmem:[#allocation13 + $0x78] sm:$0xff]
    %v482 = vld [vmem:[%s8] sm:$0x3]
    %v484 = vperm.slane %v482, 0
    %v485 = vperm.slane %v482, 1
    %v504 = vunpack.c.l.b16 %v466
    %v505 = vunpack.c.h.b16 %v466
    %v506 = vunpack.c.l.b16 %v467
    %v507 = vunpack.c.h.b16 %v467
    %v508 = vunpack.c.l.b16 %v468
    %v509 = vunpack.c.h.b16 %v468
    %v510 = vunpack.c.l.b16 %v469
    %v511 = vunpack.c.h.b16 %v469
    %v512 = vunpack.c.l.b16 %v470
    %v513 = vunpack.c.h.b16 %v470
    %v514 = vunpack.c.l.b16 %v471
    %v515 = vunpack.c.h.b16 %v471
    %v516 = vunpack.c.l.b16 %v472
    %v517 = vunpack.c.h.b16 %v472
    %v518 = vunpack.c.l.b16 %v473
    %v519 = vunpack.c.h.b16 %v473
    %v520 = vunpack.c.l.b16 %v474
    %v521 = vunpack.c.h.b16 %v474
    %v522 = vunpack.c.l.b16 %v475
    %v523 = vunpack.c.h.b16 %v475
    %v524 = vunpack.c.l.b16 %v476
    %v525 = vunpack.c.h.b16 %v476
    %v526 = vunpack.c.l.b16 %v477
    %v527 = vunpack.c.h.b16 %v477
    %v528 = vunpack.c.l.b16 %v478
    %v529 = vunpack.c.h.b16 %v478
    %v530 = vunpack.c.l.b16 %v479
    %v531 = vunpack.c.h.b16 %v479
    %v532 = vunpack.c.l.b16 %v480
    %v533 = vunpack.c.h.b16 %v480
    %v534 = vunpack.c.l.b16 %v481
    %v535 = vunpack.c.h.b16 %v481
    %v536 = vpack.c.b16 %v506, %v504
    %v537 = vpack.c.b16 %v507, %v505
    %v538 = vpack.c.b16 %v510, %v508
    %v539 = vpack.c.b16 %v511, %v509
    %v540 = vpack.c.b16 %v514, %v512
    %v541 = vpack.c.b16 %v515, %v513
    %v542 = vpack.c.b16 %v518, %v516
    %v543 = vpack.c.b16 %v519, %v517
    %v544 = vpack.c.b16 %v522, %v520
    %v545 = vpack.c.b16 %v523, %v521
    %v546 = vpack.c.b16 %v526, %v524
    %v547 = vpack.c.b16 %v527, %v525
    %v548 = vpack.c.b16 %v530, %v528
    %v549 = vpack.c.b16 %v531, %v529
    %v550 = vpack.c.b16 %v534, %v532
    %v551 = vpack.c.b16 %v535, %v533
    %568 = vmatpush.bf16.msra.mxu0 %v550
    %569 = vmatpush.bf16.msra.mxu0 %v548
    %570 = vmatpush.bf16.msra.mxu0 %v546
    %571 = vmatpush.bf16.msra.mxu0 %v544
    %572 = vmatpush.bf16.msra.mxu0 %v542
    %573 = vmatpush.bf16.msra.mxu0 %v540
    %574 = vmatpush.bf16.msra.mxu0 %v538
    %575 = vmatpush.bf16.msra.mxu0 %v536
    %576 = vmatmul.bf16.gmra.mxu0 %v465
    %v577 = vpop.f32.mrf.mxu0
    %v578 = vadd.f32 %v484, %v577
    %v579 = vpop.f32.mrf.mxu0
    %580 = vdwg.mxu0
    %581 = vmatpush.bf16.msra.mxu0 %v551
    %582 = vmatpush.bf16.msra.mxu0 %v549
    %583 = vmatpush.bf16.msra.mxu0 %v547
    %584 = vmatpush.bf16.msra.mxu0 %v545
    %585 = vmatpush.bf16.msra.mxu0 %v543
    %586 = vmatpush.bf16.msra.mxu0 %v541
    %587 = vmatpush.bf16.msra.mxu0 %v539
    %588 = vmatpush.bf16.msra.mxu0 %v537
    %589 = vmatmul.bf16.gmra.mxu0 %v465
    %v590 = vpop.f32.mrf.mxu0
    %v591 = vadd.f32 %v485, %v590
    %v592 = vpop.f32.mrf.mxu0
    %593 = vdwg.mxu0
    %v594 = vmax.f32 %v578, 0.0
    %v595 = vmax.f32 %v591, 0.0
    %596 = vst [vmem:[#allocation14] sm:$0xff] %v594
    %597 = vst [vmem:[#allocation14 + $0x8] sm:$0xff] %v595
    // Predicated region
    $region66: #{autoencoder_forward.1} parent=1 // pred_check
      _
    $region67: #{autoencoder_forward.1} parent=1 // pred_check_branch
      %599 = sbr.rel (0) target = $region69
    $region68: #{autoencoder_forward.1} parent=1 // pred_region
      %601 = vsyncadd [#allocation4], 0
      %s603 = sshll.u32 [#allocation14], 4
      %s604 = int_to_ptr.vmem [resolvable:$true] %s603
      %s605 = sshll.u32 %s9, 4
      %s606 = int_to_ptr.hbm [resolvable:$true] %s605
      %608 = dma.vmem_to_hbm [thread:$0]  %s604, 256, %s606, [#allocation4]
    $region69: #{autoencoder_forward.1} parent=1 // pred_fallthru
      _
    // Predicated region
    $region70: #{autoencoder_forward.1} parent=1 // pred_check
      _
    $region71: #{autoencoder_forward.1} parent=1 // pred_check_branch
      %610 = sbr.rel (0) target = $region73
    $region72: #{autoencoder_forward.1} parent=1 // pred_region
      %612 = dma.done [#allocation4], 256
    $region73: #{autoencoder_forward.1} parent=1 // pred_fallthru
      _
    %613 = vsyncpa [#allocation3], 1
    %614 = vsyncpa [#allocation6], 1
    %615 = vsyncpa [#allocation9], 1
    %616 = vsyncpa [#allocation12], 1
    %617 = vsyncpa [#allocation4], 1

</llo_original>
